<compile_context>
chip_gen: v7x
topology: tpu7x:2x2x1
jax: 0.10.0
libtpu: 0.0.40
codegen_flags: <defaults>
</compile_context>

<pallas_src>
import jax
import jax.numpy as jnp
from jax.experimental import pallas as pl
from jax.experimental.pallas import tpu as pltpu

IGNORE_LABEL = 255
SIZE_AVERAGE = True
LANES = 128
NUM_PARALLEL = 2  # outer 'parallel' grid axis (v7x megacore); fine on 1-TC chips


def _make_kernel(c, nblocks, bpc):
    def kernel(x_ref, t_ref, sum_ref, cnt_ref, acc_s, acc_c):
        p = pl.program_id(0)
        i = pl.program_id(1)

        @pl.when(i == 0)
        def _init():
            acc_s[...] = jnp.zeros_like(acc_s)
            acc_c[...] = jnp.zeros_like(acc_c)

        # Scalar guard: skip the clamped duplicate block that the parallel
        # split can produce (replaces the old per-element column mask).
        @pl.when(p * bpc + i < nblocks)
        def _accumulate():
            t = t_ref[...]  # (s_block, 128) int32

            # Pass 1: per-row max over classes, in the native input dtype
            # (bf16 stays bf16 on v6e/v7x; v5e inputs are normally f32).
            m = x_ref[0]
            for k in range(1, c):
                m = jnp.maximum(m, x_ref[k])
            m = m.astype(jnp.float32)

            # Pass 2: exp-sum + target select.  Re-reads the VMEM block
            # (vld slots are cheap) instead of holding c f32 copies live.
            esum = jnp.zeros_like(m)
            tgt = jnp.zeros_like(m)
            for k in range(c):
                xc = x_ref[k].astype(jnp.float32) - m
                esum = esum + jnp.exp(xc)
                tgt = jnp.where(t == k, xc, tgt)  # select-overwrite

            # -log_softmax(x)[t] = log(sum(exp(x - m))) - (x[t] - m)
            nll = jnp.log(esum) - tgt
            valid = t != IGNORE_LABEL
            validf = valid.astype(jnp.float32)
            contrib = jnp.where(valid, nll, 0.0)

            # Log-tree fold (s_block, 128) -> (8, 128); s_block is 8 * 2^k.
            def fold8(v):
                s = v.shape[0]
                while s > 8:
                    s //= 2
                    v = v[:s] + v[s:]
                return v

            acc_s[...] += fold8(contrib)
            acc_c[...] += fold8(validf)

        @pl.when(i == bpc - 1)
        def _finalize():
            sum_ref[0] = acc_s[...]
            cnt_ref[0] = acc_c[...]

    return kernel


def _tpu_defaults():
    """(block_bytes, vmem_limit_bytes), generation-aware.

    v5e/v6e have 128 MiB physical VMEM -> bigger blocks, higher scoped limit.
    v7x has 64 MiB -> stay conservative.  Falls back to safe defaults if the
    hardware query is unavailable.
    """
    try:
        cap = pltpu.get_tpu_info().vmem_capacity_bytes
    except Exception:
        return 2 * 1024 * 1024, 32 * 1024 * 1024
    if cap >= 96 * 1024 * 1024:  # v5e / v6e class
        return 6 * 1024 * 1024, 96 * 1024 * 1024
    return 3 * 1024 * 1024, 44 * 1024 * 1024  # v7x class (64 MiB physical)


def cross_entropy_2d(predict, target, weight=None, *, block_bytes=None):
    """predict: (n, c, h, w); target: (n, h, w) int.  Returns scalar loss.

    TODO(synk): the optional per-class `weight` arg is not implemented (the
    module always builds its criterion with weight=None, so forward ignores
    it).
    """
    n, c, h, w = predict.shape
    n_rows = n * h * w
    itemsize = jnp.dtype(predict.dtype).itemsize

    auto_block, vmem_limit = _tpu_defaults()
    if block_bytes is None:
        block_bytes = auto_block

    R = pl.cdiv(n_rows, LANES)  # number of 128-row tiles of logical rows

    # s_block: power-of-two multiple of 8 row-tiles per grid step, targeting
    # ~block_bytes of logits, capped by the data, then shrunk (floor 64) so
    # each parallel chunk gets >= 3 inner blocks (v7x megacore balance).
    s_target = max(8, block_bytes // (c * LANES * itemsize))
    s_block = 8
    while s_block * 2 <= s_target:
        s_block *= 2
    while s_block > 8 and s_block >= 2 * R:
        s_block //= 2
    while s_block > 64 and pl.cdiv(R, s_block) < 3 * NUM_PARALLEL:
        s_block //= 2

    nblocks = pl.cdiv(R, s_block)
    bpc = pl.cdiv(nblocks, NUM_PARALLEL)  # inner blocks per parallel chunk
    R_pad = nblocks * s_block
    n_rows_pad = R_pad * LANES

    # Exactly mirror the PyTorch module: predict.view(-1, c), target.view(-1).
    flat = jnp.reshape(predict, (n_rows, c))
    t1 = jnp.reshape(target, (n_rows,)).astype(jnp.int32)
    if n_rows_pad != n_rows:
        # Pad rows so the grid covers the arrays exactly; padded targets are
        # IGNORE_LABEL so they contribute nothing (no in-kernel tail mask).
        flat = jnp.pad(flat, ((0, n_rows_pad - n_rows), (0, 0)))
        t1 = jnp.pad(t1, (0, n_rows_pad - n_rows),
                     constant_values=IGNORE_LABEL)

    # Lane-dense (c, R_pad, 128) layout: one fused pad+reshape+transpose copy.
    x3 = jnp.transpose(jnp.reshape(flat, (R_pad, LANES, c)), (2, 0, 1))
    t2 = jnp.reshape(t1, (R_pad, LANES))

    kernel = _make_kernel(c, nblocks, bpc)

    cost = pl.CostEstimate(
        flops=6 * n_rows * c,
        transcendentals=n_rows * (c + 1),
        bytes_accessed=n_rows * c * itemsize + n_rows * 4,
    )

    def x_map(p, i):
        return (0, jnp.minimum(p * bpc + i, nblocks - 1), 0)

    def t_map(p, i):
        return (jnp.minimum(p * bpc + i, nblocks - 1), 0)

    sum_parts, cnt_parts = pl.pallas_call(
        kernel,
        out_shape=(
            jax.ShapeDtypeStruct((NUM_PARALLEL, 8, LANES), jnp.float32),
            jax.ShapeDtypeStruct((NUM_PARALLEL, 8, LANES), jnp.float32),
        ),
        grid_spec=pltpu.PrefetchScalarGridSpec(
            num_scalar_prefetch=0,
            grid=(NUM_PARALLEL, bpc),
            in_specs=[
                pl.BlockSpec((c, s_block, LANES), x_map),
                pl.BlockSpec((s_block, LANES), t_map),
            ],
            out_specs=[
                pl.BlockSpec((1, 8, LANES), lambda p, i: (p, 0, 0)),
                pl.BlockSpec((1, 8, LANES), lambda p, i: (p, 0, 0)),
            ],
            scratch_shapes=[
                pltpu.VMEM((8, LANES), jnp.float32),
                pltpu.VMEM((8, LANES), jnp.float32),
            ],
        ),
        compiler_params=pltpu.CompilerParams(
            dimension_semantics=("parallel", "arbitrary"),
            vmem_limit_bytes=vmem_limit,
        ),
        cost_estimate=cost,
    )(x3, t2)

    total = jnp.sum(sum_parts)
    count = jnp.sum(cnt_parts)
    # count == 0 (every pixel ignored) -> NaN, same as PyTorch mean reduction.
    return total / count if SIZE_AVERAGE else total


def _reference(predict, target):
    # Pure-JAX reference of the same (view(-1, c)-without-permute) forward.
    n, c, h, w = predict.shape
    logits = jnp.reshape(predict, (-1, c)).astype(jnp.float32)
    tgt = jnp.reshape(target, (-1,))
    valid = tgt != IGNORE_LABEL
    logp = jax.nn.log_softmax(logits, axis=-1)
    tgt_safe = jnp.where(valid, tgt, 0)
    nll = -jnp.take_along_axis(logp, tgt_safe[:, None], axis=-1)[:, 0]
    nll = jnp.where(valid, nll, 0.0)
    return jnp.sum(nll) / jnp.sum(valid.astype(jnp.float32))


if __name__ == "__main__":
    key = jax.random.PRNGKey(0)
    k1, k2, k3 = jax.random.split(key, 3)

    n, c, h, w = 2, 4, 16, 16
    predict = jax.random.normal(k1, (n, c, h, w), dtype=jnp.float32)
    target = jax.random.randint(k2, (n, h, w), 0, c, dtype=jnp.int32)
    # sprinkle in some ignore_label pixels
    ignore_mask = jax.random.uniform(k3, (n, h, w)) < 0.1
    target = jnp.where(ignore_mask, IGNORE_LABEL, target)

    loss = jax.jit(cross_entropy_2d)(predict, target)
    loss = jax.block_until_ready(loss)

    ref = _reference(predict, target)
    assert jnp.allclose(loss, ref, atol=1e-4, rtol=1e-4), (loss, ref)

    print("KERNEL_OK")
</pallas_src>

<mosaic_0001>
module attributes {stable_mosaic.version = 11 : i64} {
  func.func @kernel(%arg0: i32, %arg1: i32, %arg2: memref<4x8x128xf32, #tpu.memory_space<vmem>>, %arg3: memref<8x128xi32, #tpu.memory_space<vmem>>, %arg4: memref<1x8x128xf32, #tpu.memory_space<vmem>>, %arg5: memref<1x8x128xf32, #tpu.memory_space<vmem>>, %arg6: memref<8x128xf32, #tpu.memory_space<vmem>>, %arg7: memref<8x128xf32, #tpu.memory_space<vmem>>) attributes {dimension_semantics = [#tpu.dimension_semantics<parallel>, #tpu.dimension_semantics<arbitrary>], iteration_bounds = array<i64: 2, 1>, scalar_prefetch = 0 : i64, scratch_operands = 2 : i64, tpu.core_type = #tpu.core_type<tc>, window_params = [{transform_indices = @transform_0, window_bounds = array<i64: 4, 8, 128>}, {transform_indices = @transform_1, window_bounds = array<i64: 8, 128>}, {transform_indices = @transform_2, window_bounds = array<i64: 1, 8, 128>}, {transform_indices = @transform_3, window_bounds = array<i64: 1, 8, 128>}]} {
    %c0_i32 = arith.constant 0 : i32
    %0 = arith.cmpi eq, %arg1, %c0_i32 : i32
    %1 = arith.extui %0 : i1 to i32
    %c0_i32_0 = arith.constant 0 : i32
    %2 = arith.cmpi ne, %1, %c0_i32_0 : i32
    scf.if %2 {
      %cst = arith.constant 0.000000e+00 : f32
      %11 = vector.broadcast %cst : f32 to vector<8x128xf32>
      %c0 = arith.constant 0 : index
      %c0_5 = arith.constant 0 : index
      %12 = vector.load %arg6[%c0, %c0_5] : memref<8x128xf32, #tpu.memory_space<vmem>>, vector<8x128xf32>
      tpu.vector_store %arg6[%c0, %c0_5], %11 {strides = array<i32>} : memref<8x128xf32, #tpu.memory_space<vmem>>, vector<8x128xf32>,
      %cst_6 = arith.constant 0.000000e+00 : f32
      %13 = vector.broadcast %cst_6 : f32 to vector<8x128xf32>
      %c0_7 = arith.constant 0 : index
      %c0_8 = arith.constant 0 : index
      %14 = vector.load %arg7[%c0_7, %c0_8] : memref<8x128xf32, #tpu.memory_space<vmem>>, vector<8x128xf32>
      tpu.vector_store %arg7[%c0_7, %c0_8], %13 {strides = array<i32>} : memref<8x128xf32, #tpu.memory_space<vmem>>, vector<8x128xf32>,
    } else {
    }
    %c1_i32 = arith.constant 1 : i32
    %3 = arith.muli %arg0, %c1_i32 : i32
    %4 = arith.addi %3, %arg1 : i32
    %c1_i32_1 = arith.constant 1 : i32
    %5 = arith.cmpi slt, %4, %c1_i32_1 : i32
    %6 = arith.extui %5 : i1 to i32
    %c0_i32_2 = arith.constant 0 : i32
    %7 = arith.cmpi ne, %6, %c0_i32_2 : i32
    scf.if %7 {
      %c0 = arith.constant 0 : index
      %c0_5 = arith.constant 0 : index
      %11 = vector.load %arg3[%c0, %c0_5] : memref<8x128xi32, #tpu.memory_space<vmem>>, vector<8x128xi32>
      %c0_6 = arith.constant 0 : index
      %c0_7 = arith.constant 0 : index
      %c0_8 = arith.constant 0 : index
      %12 = vector.load %arg2[%c0_6, %c0_7, %c0_8] : memref<4x8x128xf32, #tpu.memory_space<vmem>>, vector<1x8x128xf32>
      %13 = vector.shape_cast %12 : vector<1x8x128xf32> to vector<8x128xf32>
      %c1 = arith.constant 1 : index
      %c0_9 = arith.constant 0 : index
      %c0_10 = arith.constant 0 : index
      %14 = vector.load %arg2[%c1, %c0_9, %c0_10] : memref<4x8x128xf32, #tpu.memory_space<vmem>>, vector<1x8x128xf32>
      %15 = vector.shape_cast %14 : vector<1x8x128xf32> to vector<8x128xf32>
      %16 = arith.maximumf %13, %15 : vector<8x128xf32>
      %c2 = arith.constant 2 : index
      %c0_11 = arith.constant 0 : index
      %c0_12 = arith.constant 0 : index
      %17 = vector.load %arg2[%c2, %c0_11, %c0_12] : memref<4x8x128xf32, #tpu.memory_space<vmem>>, vector<1x8x128xf32>
      %18 = vector.shape_cast %17 : vector<1x8x128xf32> to vector<8x128xf32>
      %19 = arith.maximumf %16, %18 : vector<8x128xf32>
      %c3 = arith.constant 3 : index
      %c0_13 = arith.constant 0 : index
      %c0_14 = arith.constant 0 : index
      %20 = vector.load %arg2[%c3, %c0_13, %c0_14] : memref<4x8x128xf32, #tpu.memory_space<vmem>>, vector<1x8x128xf32>
      %21 = vector.shape_cast %20 : vector<1x8x128xf32> to vector<8x128xf32>
      %22 = arith.maximumf %19, %21 : vector<8x128xf32>
      %cst = arith.constant 0.000000e+00 : f32
      %23 = vector.broadcast %cst : f32 to vector<8x128xf32>
      %cst_15 = arith.constant 0.000000e+00 : f32
      %24 = vector.broadcast %cst_15 : f32 to vector<8x128xf32>
      %c0_16 = arith.constant 0 : index
      %c0_17 = arith.constant 0 : index
      %c0_18 = arith.constant 0 : index
      %25 = vector.load %arg2[%c0_16, %c0_17, %c0_18] : memref<4x8x128xf32, #tpu.memory_space<vmem>>, vector<1x8x128xf32>
      %26 = vector.shape_cast %25 : vector<1x8x128xf32> to vector<8x128xf32>
      %27 = arith.subf %26, %22 : vector<8x128xf32>
      %28 = math.exp %27 : vector<8x128xf32>
      %29 = arith.addf %23, %28 : vector<8x128xf32>
      %c0_i32_19 = arith.constant 0 : i32
      %30 = vector.broadcast %c0_i32_19 : i32 to vector<8x128xi32>
      %31 = arith.cmpi eq, %11, %30 : vector<8x128xi32>
      %32 = arith.select %31, %27, %24 : vector<8x128xi1>, vector<8x128xf32>
      %c1_20 = arith.constant 1 : index
      %c0_21 = arith.constant 0 : index
      %c0_22 = arith.constant 0 : index
      %33 = vector.load %arg2[%c1_20, %c0_21, %c0_22] : memref<4x8x128xf32, #tpu.memory_space<vmem>>, vector<1x8x128xf32>
      %34 = vector.shape_cast %33 : vector<1x8x128xf32> to vector<8x128xf32>
      %35 = arith.subf %34, %22 : vector<8x128xf32>
      %36 = math.exp %35 : vector<8x128xf32>
      %37 = arith.addf %29, %36 : vector<8x128xf32>
      %c1_i32_23 = arith.constant 1 : i32
      %38 = vector.broadcast %c1_i32_23 : i32 to vector<8x128xi32>
      %39 = arith.cmpi eq, %11, %38 : vector<8x128xi32>
      %40 = arith.select %39, %35, %32 : vector<8x128xi1>, vector<8x128xf32>
      %c2_24 = arith.constant 2 : index
      %c0_25 = arith.constant 0 : index
      %c0_26 = arith.constant 0 : index
      %41 = vector.load %arg2[%c2_24, %c0_25, %c0_26] : memref<4x8x128xf32, #tpu.memory_space<vmem>>, vector<1x8x128xf32>
      %42 = vector.shape_cast %41 : vector<1x8x128xf32> to vector<8x128xf32>
      %43 = arith.subf %42, %22 : vector<8x128xf32>
      %44 = math.exp %43 : vector<8x128xf32>
      %45 = arith.addf %37, %44 : vector<8x128xf32>
      %c2_i32 = arith.constant 2 : i32
      %46 = vector.broadcast %c2_i32 : i32 to vector<8x128xi32>
      %47 = arith.cmpi eq, %11, %46 : vector<8x128xi32>
      %48 = arith.select %47, %43, %40 : vector<8x128xi1>, vector<8x128xf32>
      %c3_27 = arith.constant 3 : index
      %c0_28 = arith.constant 0 : index
      %c0_29 = arith.constant 0 : index
      %49 = vector.load %arg2[%c3_27, %c0_28, %c0_29] : memref<4x8x128xf32, #tpu.memory_space<vmem>>, vector<1x8x128xf32>
      %50 = vector.shape_cast %49 : vector<1x8x128xf32> to vector<8x128xf32>
      %51 = arith.subf %50, %22 : vector<8x128xf32>
      %52 = math.exp %51 : vector<8x128xf32>
      %53 = arith.addf %45, %52 : vector<8x128xf32>
      %c3_i32 = arith.constant 3 : i32
      %54 = vector.broadcast %c3_i32 : i32 to vector<8x128xi32>
      %55 = arith.cmpi eq, %11, %54 : vector<8x128xi32>
      %56 = arith.select %55, %51, %48 : vector<8x128xi1>, vector<8x128xf32>
      %57 = math.log %53 : vector<8x128xf32>
      %58 = arith.subf %57, %56 : vector<8x128xf32>
      %c255_i32 = arith.constant 255 : i32
      %59 = vector.broadcast %c255_i32 : i32 to vector<8x128xi32>
      %60 = arith.cmpi ne, %11, %59 : vector<8x128xi32>
      %61 = arith.extui %60 : vector<8x128xi1> to vector<8x128xi32>
      %62 = arith.sitofp %61 : vector<8x128xi32> to vector<8x128xf32>
      %cst_30 = arith.constant 0.000000e+00 : f32
      %63 = vector.broadcast %cst_30 : f32 to vector<8x128xf32>
      %64 = arith.select %60, %58, %63 : vector<8x128xi1>, vector<8x128xf32>
      %c0_31 = arith.constant 0 : index
      %c0_32 = arith.constant 0 : index
      %65 = vector.load %arg6[%c0_31, %c0_32] : memref<8x128xf32, #tpu.memory_space<vmem>>, vector<8x128xf32>
      %66 = arith.addf %65, %64 : vector<8x128xf32>
      %c0_33 = arith.constant 0 : index
      %c0_34 = arith.constant 0 : index
      %67 = vector.load %arg6[%c0_33, %c0_34] : memref<8x128xf32, #tpu.memory_space<vmem>>, vector<8x128xf32>
      tpu.vector_store %arg6[%c0_33, %c0_34], %66 {strides = array<i32>} : memref<8x128xf32, #tpu.memory_space<vmem>>, vector<8x128xf32>,
      %c0_35 = arith.constant 0 : index
      %c0_36 = arith.constant 0 : index
      %68 = vector.load %arg7[%c0_35, %c0_36] : memref<8x128xf32, #tpu.memory_space<vmem>>, vector<8x128xf32>
      %69 = arith.addf %68, %62 : vector<8x128xf32>
      %c0_37 = arith.constant 0 : index
      %c0_38 = arith.constant 0 : index
      %70 = vector.load %arg7[%c0_37, %c0_38] : memref<8x128xf32, #tpu.memory_space<vmem>>, vector<8x128xf32>
      tpu.vector_store %arg7[%c0_37, %c0_38], %69 {strides = array<i32>} : memref<8x128xf32, #tpu.memory_space<vmem>>, vector<8x128xf32>,
    } else {
    }
    %c0_i32_3 = arith.constant 0 : i32
    %8 = arith.cmpi eq, %arg1, %c0_i32_3 : i32
    %9 = arith.extui %8 : i1 to i32
    %c0_i32_4 = arith.constant 0 : i32
    %10 = arith.cmpi ne, %9, %c0_i32_4 : i32
    scf.if %10 {
      %c0 = arith.constant 0 : index
      %c0_5 = arith.constant 0 : index
      %11 = vector.load %arg6[%c0, %c0_5] : memref<8x128xf32, #tpu.memory_space<vmem>>, vector<8x128xf32>
      %c0_6 = arith.constant 0 : index
      %c0_7 = arith.constant 0 : index
      %c0_8 = arith.constant 0 : index
      %12 = vector.load %arg4[%c0_6, %c0_7, %c0_8] : memref<1x8x128xf32, #tpu.memory_space<vmem>>, vector<1x8x128xf32>
      %13 = vector.shape_cast %12 : vector<1x8x128xf32> to vector<8x128xf32>
      %14 = vector.shape_cast %11 : vector<8x128xf32> to vector<1x8x128xf32>
      tpu.vector_store %arg4[%c0_6, %c0_7, %c0_8], %14 {strides = array<i32>} : memref<1x8x128xf32, #tpu.memory_space<vmem>>, vector<1x8x128xf32>,
      %c0_9 = arith.constant 0 : index
      %c0_10 = arith.constant 0 : index
      %15 = vector.load %arg7[%c0_9, %c0_10] : memref<8x128xf32, #tpu.memory_space<vmem>>, vector<8x128xf32>
      %c0_11 = arith.constant 0 : index
      %c0_12 = arith.constant 0 : index
      %c0_13 = arith.constant 0 : index
      %16 = vector.load %arg5[%c0_11, %c0_12, %c0_13] : memref<1x8x128xf32, #tpu.memory_space<vmem>>, vector<1x8x128xf32>
      %17 = vector.shape_cast %16 : vector<1x8x128xf32> to vector<8x128xf32>
      %18 = vector.shape_cast %15 : vector<8x128xf32> to vector<1x8x128xf32>
      tpu.vector_store %arg5[%c0_11, %c0_12, %c0_13], %18 {strides = array<i32>} : memref<1x8x128xf32, #tpu.memory_space<vmem>>, vector<1x8x128xf32>,
    } else {
    }
    return
  }
  func.func @transform_0(%arg0: i32, %arg1: i32) -> (i32, i32, i32) {
    %c1_i32 = arith.constant 1 : i32
    %0 = arith.muli %arg0, %c1_i32 : i32
    %1 = arith.addi %0, %arg1 : i32
    %c0_i32 = arith.constant 0 : i32
    %2 = arith.minsi %1, %c0_i32 : i32
    %c0_i32_0 = arith.constant 0 : i32
    %c0_i32_1 = arith.constant 0 : i32
    %c0_i32_2 = arith.constant 0 : i32
    return %c0_i32_0, %2, %c0_i32_1 : i32, i32, i32
  }
  func.func @transform_1(%arg0: i32, %arg1: i32) -> (i32, i32) {
    %c1_i32 = arith.constant 1 : i32
    %0 = arith.muli %arg0, %c1_i32 : i32
    %1 = arith.addi %0, %arg1 : i32
    %c0_i32 = arith.constant 0 : i32
    %2 = arith.minsi %1, %c0_i32 : i32
    %c0_i32_0 = arith.constant 0 : i32
    %c0_i32_1 = arith.constant 0 : i32
    return %2, %c0_i32_0 : i32, i32
  }
  func.func @transform_2(%arg0: i32, %arg1: i32) -> (i32, i32, i32) {
    %c0_i32 = arith.constant 0 : i32
    %c0_i32_0 = arith.constant 0 : i32
    %c0_i32_1 = arith.constant 0 : i32
    return %arg0, %c0_i32, %c0_i32_0 : i32, i32, i32
  }
  func.func @transform_3(%arg0: i32, %arg1: i32) -> (i32, i32, i32) {
    %c0_i32 = arith.constant 0 : i32
    %c0_i32_0 = arith.constant 0 : i32
    %c0_i32_1 = arith.constant 0 : i32
    return %arg0, %c0_i32, %c0_i32_0 : i32, i32, i32
  }
}

</mosaic_0001>

<llo_original>
// kernel: cross_entropy_2d.1
$region0: #{cross_entropy_2d.1}
  #allocation0 [shape = 'u32[]', space=smem, size = 0x4, offset = 0x4, fixed_abs, tag = 'smem constant byte address 0x4 - core index']
  #allocation1 [shape = 'u32[144,128]{1,0:T(1,128)}', space=vmem, size = 0x12000, scoped, tag = 'internal scratch']
  #allocation2 [shape = 'f32[8,128]{1,0:T(8,128)}', space=vmem, size = 0x1000, scoped, tag = 'scratch operand']
  #allocation3 [shape = 'f32[8,128]{1,0:T(8,128)}', space=vmem, size = 0x1000, scoped, tag = 'scratch operand']
  %s0 = inlined_call_operand.vmem [shape: f32[4,8,128], index: 0, kind: input, shape index: {}]
  %s1 = inlined_call_operand.vmem [shape: s32[8,128], index: 1, kind: input, shape index: {}]
  %s2 = inlined_call_operand.vmem [shape: f32[2,8,128], index: 2, kind: output, shape index: {0}]
  %s3 = inlined_call_operand.vmem [shape: f32[2,8,128], index: 3, kind: output, shape index: {1}]
  %4 = xla_tuple %s2, %s3
  %s5 = sld [smem:[#allocation0]]
  $region61: #{cross_entropy_2d.1} parent=0
    _
  %s7 = ssub.s32 1, %s5
  %s8 = scalar_select 0, %s7, %s5
  loop: start=0, step=1, limit=4
  $region2: #{cross_entropy_2d.1} parent=0 // loop_pre_header
    _
  $region3: #{cross_entropy_2d.1} parent=0 // loop_header
    %s10 = sphi 0, %s14
    %p11 = scmp.ge.s32.totalorder %s10, 4
    %s17 = sphi 0, %s29
    %s18 = sphi 0, %s25
    %s19 = sphi 0, %s17
    %s20 = sphi 0, %s18
    %s21 = sphi 0, %s19
    %s22 = sphi 0, %s20
    %s38 = sphi 0, %s40
    %s41 = sphi 0, %s38
    %s42 = sphi 0, %s41
    %s58 = sphi 0, %s42
    %s70 = sphi 0, %s72
    %s73 = sphi 0, %s70
    %s74 = sphi 0, %s73
    %s90 = sphi 0, %s74
    %s96 = sphi 0, %s98
    %s99 = sphi 0, %s96
    %s100 = sphi 0, %s99
    %s116 = sphi 0, %s100
    %s122 = sphi 0, %s124
    %s125 = sphi 0, %s122
    %s126 = sphi 0, %s125
    %s142 = sphi 0, %s126
  $region4: #{cross_entropy_2d.1} parent=0 // loop_header_branch
    %13 = sbr.rel (%p11) target = $region8
  $region5: #{cross_entropy_2d.1} parent=0 // loop_body
    %s15 = ssub.s32 %s10, 1
    %s16 = ssub.s32 %s10, 2
    %s23 = sadd.s32 1, %s18
    %p24 = scmp.ge.s32.totalorder %s23, 1
    %s25 = scalar_select %p24, 0, %s23
    %s26 = sadd.s32 1, %s17
    %s27 = scalar_select %p24, %s26, %s17
    %p28 = scmp.ge.s32.totalorder %s27, 2
    %s29 = scalar_select %p28, 0, %s27
    %s30 = sadd.s32 %s17, %s18
    %p31 = scmp.lt.s32.totalorder %s30, 0
    %s32 = scalar_select %p31, %s30, 0
    %s33 = sadd.s32 %s29, %s25
    %p34 = scmp.lt.s32.totalorder %s33, 0
    %s35 = scalar_select %p34, %s33, 0
    %s36 = ssub.s32 %s32, %s35
    %p37 = scmp.eq.s32.totalorder %s36, 0
    %s39 = sadd.s32 %s38, 1
    %s40 = scalar_select %p37, %s38, %s39
    %p43 = pneg %p37
    %p44 = scmp.eq.s32.totalorder %s10, 1
    %p45 = por %p43, %p44
    %p46 = scmp.ne.s32.totalorder %s38, %s41
    %p47 = scmp.eq.s32.totalorder %s10, 0
    %p48 = por %p46, %p47
    %p49 = scmp.ne.s32.totalorder %s38, %s41
    %p50 = scmp.eq.s32.totalorder %s15, 1
    %p51 = por %p49, %p50
    %p52 = scmp.ne.s32.totalorder %s41, %s42
    %p53 = scmp.eq.s32.totalorder %s15, 0
    %p54 = por %p52, %p53
    %p55 = scmp.ne.s32.totalorder %s41, %s42
    %p56 = scmp.eq.s32.totalorder %s16, 1
    %p57 = por %p55, %p56
    %p59 = scmp.ne.s32.totalorder %s42, %s58
    %p60 = scmp.eq.s32.totalorder %s16, 0
    %p61 = por %p59, %p60
    %s62 = sadd.s32 %s17, %s18
    %p63 = scmp.lt.s32.totalorder %s62, 0
    %s64 = scalar_select %p63, %s62, 0
    %s65 = sadd.s32 %s29, %s25
    %p66 = scmp.lt.s32.totalorder %s65, 0
    %s67 = scalar_select %p66, %s65, 0
    %s68 = ssub.s32 %s64, %s67
    %p69 = scmp.eq.s32.totalorder %s68, 0
    %s71 = sadd.s32 %s70, 1
    %s72 = scalar_select %p69, %s70, %s71
    %p75 = pneg %p69
    %p76 = scmp.eq.s32.totalorder %s10, 1
    %p77 = por %p75, %p76
    %p78 = scmp.ne.s32.totalorder %s70, %s73
    %p79 = scmp.eq.s32.totalorder %s10, 0
    %p80 = por %p78, %p79
    %p81 = scmp.ne.s32.totalorder %s70, %s73
    %p82 = scmp.eq.s32.totalorder %s15, 1
    %p83 = por %p81, %p82
    %p84 = scmp.ne.s32.totalorder %s73, %s74
    %p85 = scmp.eq.s32.totalorder %s15, 0
    %p86 = por %p84, %p85
    %p87 = scmp.ne.s32.totalorder %s73, %s74
    %p88 = scmp.eq.s32.totalorder %s16, 1
    %p89 = por %p87, %p88
    %p91 = scmp.ne.s32.totalorder %s74, %s90
    %p92 = scmp.eq.s32.totalorder %s16, 0
    %p93 = por %p91, %p92
    %s94 = ssub.s32 %s17, %s29
    %p95 = scmp.eq.s32.totalorder %s94, 0
    %s97 = sadd.s32 %s96, 1
    %s98 = scalar_select %p95, %s96, %s97
    %p101 = pneg %p95
    %p102 = scmp.eq.s32.totalorder %s10, 1
    %p103 = por %p101, %p102
    %p104 = scmp.ne.s32.totalorder %s96, %s99
    %p105 = scmp.eq.s32.totalorder %s10, 0
    %p106 = por %p104, %p105
    %p107 = scmp.ne.s32.totalorder %s96, %s99
    %p108 = scmp.eq.s32.totalorder %s15, 1
    %p109 = por %p107, %p108
    %p110 = scmp.ne.s32.totalorder %s99, %s100
    %p111 = scmp.eq.s32.totalorder %s15, 0
    %p112 = por %p110, %p111
    %p113 = scmp.ne.s32.totalorder %s99, %s100
    %p114 = scmp.eq.s32.totalorder %s16, 1
    %p115 = por %p113, %p114
    %p117 = scmp.ne.s32.totalorder %s100, %s116
    %p118 = scmp.eq.s32.totalorder %s16, 0
    %p119 = por %p117, %p118
    %s120 = ssub.s32 %s17, %s29
    %p121 = scmp.eq.s32.totalorder %s120, 0
    %s123 = sadd.s32 %s122, 1
    %s124 = scalar_select %p121, %s122, %s123
    %p127 = pneg %p121
    %p128 = scmp.eq.s32.totalorder %s10, 1
    %p129 = por %p127, %p128
    %p130 = scmp.ne.s32.totalorder %s122, %s125
    %p131 = scmp.eq.s32.totalorder %s10, 0
    %p132 = por %p130, %p131
    %p133 = scmp.ne.s32.totalorder %s122, %s125
    %p134 = scmp.eq.s32.totalorder %s15, 1
    %p135 = por %p133, %p134
    %p136 = scmp.ne.s32.totalorder %s125, %s126
    %p137 = scmp.eq.s32.totalorder %s15, 0
    %p138 = por %p136, %p137
    %p139 = scmp.ne.s32.totalorder %s125, %s126
    %p140 = scmp.eq.s32.totalorder %s16, 1
    %p141 = por %p139, %p140
    %p143 = scmp.ne.s32.totalorder %s126, %s142
    %p144 = scmp.eq.s32.totalorder %s16, 0
    %p145 = por %p143, %p144
    %p146 = scmp.le.s32.totalorder 1, %s10
    %p147 = scmp.lt.s32.totalorder %s10, 3
    %p148 = pnand %p146, %p147
    %p149 = pneg %p148
    // Predicated region
    $region9: #{cross_entropy_2d.1} parent=5 // pred_check
      _
    $region10: #{cross_entropy_2d.1} parent=5 // pred_check_branch
      %151 = sbr.rel (%p148) target = $region12
    $region11: #{cross_entropy_2d.1} parent=5 // pred_region
      %s152 = ssub.s32 %s10, 1
    $region12: #{cross_entropy_2d.1} parent=5 // pred_fallthru
      _
    %p153 = scmp.lt.s32.totalorder %s10, 2
    // Predicated region
    $region13: #{cross_entropy_2d.1} parent=5 // pred_check
      %p154 = pneg %p153
    $region14: #{cross_entropy_2d.1} parent=5 // pred_check_branch
      %156 = sbr.rel (%p154) target = $region16
    $region15: #{cross_entropy_2d.1} parent=5 // pred_region
      // Predicated region
      $region17: #{cross_entropy_2d.1} parent=15 // pred_check
        %p157 = pneg %p48
      $region18: #{cross_entropy_2d.1} parent=15 // pred_check_branch
        %159 = sbr.rel (%p157) target = $region20
      $region19: #{cross_entropy_2d.1} parent=15 // pred_region
        %s160 = sadd.s32 %s17, %s18
        %p161 = scmp.lt.s32.totalorder %s160, 0
        %s162 = scalar_select %p161, %s160, 0
        %p163 = scmp.lt.s32.totalorder %s162, 0
        %s164 = scalar_select %p163, %s162, 0
        %s165 = smul.addr %s164, 8
        %s166 = scalar_lea.vmem %s0, %s165
        %s167 = sadd.s32 %s17, %s18
        %p168 = scmp.lt.s32.totalorder %s167, 0
        %s169 = scalar_select %p168, %s167, 0
      $region20: #{cross_entropy_2d.1} parent=15 // pred_fallthru
        _
      // Predicated region
      $region21: #{cross_entropy_2d.1} parent=15 // pred_check
        %p170 = pneg %p80
      $region22: #{cross_entropy_2d.1} parent=15 // pred_check_branch
        %172 = sbr.rel (%p170) target = $region24
      $region23: #{cross_entropy_2d.1} parent=15 // pred_region
        %s173 = sadd.s32 %s17, %s18
        %p174 = scmp.lt.s32.totalorder %s173, 0
        %s175 = scalar_select %p174, %s173, 0
        %p176 = scmp.lt.s32.totalorder %s175, 0
        %s177 = scalar_select %p176, %s175, 0
        %s178 = smul.addr %s177, 8
        %s179 = scalar_lea.vmem %s1, %s178
        %s180 = sadd.s32 %s17, %s18
        %p181 = scmp.lt.s32.totalorder %s180, 0
        %s182 = scalar_select %p181, %s180, 0
      $region24: #{cross_entropy_2d.1} parent=15 // pred_fallthru
        _
    $region16: #{cross_entropy_2d.1} parent=5 // pred_fallthru
      _
    %p183 = scmp.le.s32.totalorder 1, %s10
    %p184 = scmp.lt.s32.totalorder %s10, 3
    %p185 = pnand %p183, %p184
    %p186 = pneg %p185
    // Predicated region
    $region25: #{cross_entropy_2d.1} parent=5 // pred_check
      _
    $region26: #{cross_entropy_2d.1} parent=5 // pred_check_branch
      %188 = sbr.rel (%p185) target = $region28
    $region27: #{cross_entropy_2d.1} parent=5 // pred_region
      %s189 = ssub.s32 %s10, 1
      %s190 = sadd.s32 %s19, %s20
      %p191 = scmp.lt.s32.totalorder %s190, 0
      %s192 = scalar_select %p191, %s190, 0
      %p193 = scmp.lt.s32.totalorder %s192, 0
      %s194 = scalar_select %p193, %s192, 0
      %s195 = smul.addr %s194, 8
      %s196 = scalar_lea.vmem %s0, %s195
      %p197 = pneg %p54
      %p198 = pneg %p51
      %s199 = sadd.s32 %s19, %s20
      %p200 = scmp.lt.s32.totalorder %s199, 0
      %s201 = scalar_select %p200, %s199, 0
      %p202 = scmp.lt.s32.totalorder %s201, 0
      %s203 = scalar_select %p202, %s201, 0
      %s204 = smul.addr %s203, 8
      %s205 = scalar_lea.vmem %s1, %s204
      %p206 = pneg %p86
      %p207 = pneg %p83
      %p208 = pneg %p112
      %p209 = pneg %p109
      %p210 = scmp.lt.s32.totalorder %s19, 1
      %s211 = scalar_select %p210, %s19, 1
      %s212 = smul.addr %s211, 8
      %s213 = scalar_lea.vmem %s2, %s212
      %p214 = pneg %p138
      %p215 = pneg %p135
      %p216 = scmp.lt.s32.totalorder %s19, 1
      %s217 = scalar_select %p216, %s19, 1
      %s218 = smul.addr %s217, 8
      %s219 = scalar_lea.vmem %s3, %s218
      %s220 = sadd.s32 %s19, %s20
      %p221 = scmp.lt.s32.totalorder %s220, 0
      %s222 = scalar_select %p221, %s220, 0
      %p223 = scmp.lt.s32.totalorder %s222, 0
      %s224 = scalar_select %p223, %s222, 0
      %s225 = smul.addr %s224, 8
      %s226 = scalar_lea.vmem %s0, %s225
      %s227 = sadd.s32 %s19, %s20
      %p228 = scmp.lt.s32.totalorder %s227, 0
      %s229 = scalar_select %p228, %s227, 0
      %s230 = sadd.s32 %s19, %s20
      %p231 = scmp.lt.s32.totalorder %s230, 0
      %s232 = scalar_select %p231, %s230, 0
      %p233 = scmp.lt.s32.totalorder %s232, 0
      %s234 = scalar_select %p233, %s232, 0
      %s235 = smul.addr %s234, 8
      %s236 = scalar_lea.vmem %s1, %s235
      %s237 = sadd.s32 %s19, %s20
      %p238 = scmp.lt.s32.totalorder %s237, 0
      %s239 = scalar_select %p238, %s237, 0
      %p240 = scmp.lt.s32.totalorder %s19, 1
      %s241 = scalar_select %p240, %s19, 1
      %s242 = smul.addr %s241, 8
      %s243 = scalar_lea.vmem %s2, %s242
      %p244 = scmp.lt.s32.totalorder %s19, 1
      %s245 = scalar_select %p244, %s19, 1
      %s246 = smul.addr %s245, 8
      %s247 = scalar_lea.vmem %s3, %s246
      %p248 = scmp.eq.s32.totalorder %s20, 0
      // Predicated region
      $region29: #{cross_entropy_2d.1} parent=27 // pred_check
        %p249 = pneg %p248
      $region30: #{cross_entropy_2d.1} parent=27 // pred_check_branch
        %251 = sbr.rel (%p249) target = $region32
      $region31: #{cross_entropy_2d.1} parent=27 // pred_region
        %252 = vst [vmem:[#allocation2] sm:$0xff] 0.0
        %253 = vst [vmem:[#allocation3] sm:$0xff] 0.0
      $region32: #{cross_entropy_2d.1} parent=27 // pred_fallthru
        _
      %s254 = sadd.s32 %s19, %s20
      %p255 = scmp.lt.s32.totalorder %s254, 1
      // Predicated region
      $region33: #{cross_entropy_2d.1} parent=27 // pred_check
        %p256 = pneg %p255
      $region34: #{cross_entropy_2d.1} parent=27 // pred_check_branch
        %258 = sbr.rel (%p256) target = $region36
      $region35: #{cross_entropy_2d.1} parent=27 // pred_region
        %v259 = vld [vmem:[%s236] sm:$0xff]
        %v260 = vld [vmem:[%s226] sm:$0xff]
        %s261 = scalar_lea.vmem %s226, 8
        %v262 = vld [vmem:[%s261] sm:$0xff]
        %v263 = vmax.f32 %v260, %v262
        %s264 = scalar_lea.vmem %s226, 16
        %v265 = vld [vmem:[%s264] sm:$0xff]
        %v266 = vmax.f32 %v263, %v265
        %s267 = scalar_lea.vmem %s226, 24
        %v268 = vld [vmem:[%s267] sm:$0xff]
        %v269 = vmax.f32 %v266, %v268
        %v270 = vsub.f32 %v260, %v269
        %v271 = vmul.f32 %v270, 1.442695
        %v272 = vpow.pop %v271
        %v273 = vadd.f32 %v272, 0.0
        %vm274 = vcmp.eq.s32.totalorder %v259, 0
        %v275 = vsel %vm274, %v270, 0.0
        %v276 = vsub.f32 %v262, %v269
        %v277 = vmul.f32 %v276, 1.442695
        %v278 = vpow.pop %v277
        %v279 = vadd.f32 %v273, %v278
        %vm280 = vcmp.eq.s32.totalorder %v259, 1
        %v281 = vsel %vm280, %v276, %v275
        %v282 = vsub.f32 %v265, %v269
        %v283 = vmul.f32 %v282, 1.442695
        %v284 = vpow.pop %v283
        %v285 = vadd.f32 %v279, %v284
        %vm286 = vcmp.eq.s32.totalorder %v259, 2
        %v287 = vsel %vm286, %v282, %v281
        %v288 = vsub.f32 %v268, %v269
        %v289 = vmul.f32 %v288, 1.442695
        %v290 = vpow.pop %v289
        %v291 = vadd.f32 %v285, %v290
        %vm292 = vcmp.eq.s32.totalorder %v259, 3
        %v293 = vsel %vm292, %v288, %v287
        %v294 = vlog2.pop %v291
        %v295 = vmul.f32 %v294, 0.6931472
        %v296 = vsub.f32 %v295, %v293
        %vm297 = vcmp.ne.s32.totalorder %v259, 255
        %v298 = vsel %vm297, 1, 0
        %v299 = vcvt.s32.f32 %v298
        %v300 = vsel %vm297, %v296, 0.0
        %v301 = vld [vmem:[#allocation2] sm:$0xff]
        %v302 = vadd.f32 %v301, %v300
        %303 = vst [vmem:[#allocation2] sm:$0xff] %v302
        %v304 = vld [vmem:[#allocation3] sm:$0xff]
        %v305 = vadd.f32 %v304, %v299
        %306 = vst [vmem:[#allocation3] sm:$0xff] %v305
      $region36: #{cross_entropy_2d.1} parent=27 // pred_fallthru
        _
      // Predicated region
      $region37: #{cross_entropy_2d.1} parent=27 // pred_check
        %p307 = pneg %p248
      $region38: #{cross_entropy_2d.1} parent=27 // pred_check_branch
        %309 = sbr.rel (%p307) target = $region40
      $region39: #{cross_entropy_2d.1} parent=27 // pred_region
        %v310 = vld [vmem:[#allocation2] sm:$0xff]
        %311 = vst [vmem:[%s243] sm:$0xff] %v310
        %v312 = vld [vmem:[#allocation3] sm:$0xff]
        %313 = vst [vmem:[%s247] sm:$0xff] %v312
      $region40: #{cross_entropy_2d.1} parent=27 // pred_fallthru
        _
      %p314 = scmp.lt.s32.totalorder %s19, 1
      %s315 = scalar_select %p314, %s19, 1
      %s316 = smul.addr %s315, 8
      %s317 = scalar_lea.vmem %s2, %s316
      %p318 = scmp.lt.s32.totalorder %s19, 1
      %s319 = scalar_select %p318, %s19, 1
      %s320 = smul.addr %s319, 8
      %s321 = scalar_lea.vmem %s3, %s320
      // Predicated region
      $region41: #{cross_entropy_2d.1} parent=27 // pred_check
        %p322 = pneg %p109
      $region42: #{cross_entropy_2d.1} parent=27 // pred_check_branch
        %324 = sbr.rel (%p322) target = $region44
      $region43: #{cross_entropy_2d.1} parent=27 // pred_region
        _
      $region44: #{cross_entropy_2d.1} parent=27 // pred_fallthru
        _
      // Predicated region
      $region45: #{cross_entropy_2d.1} parent=27 // pred_check
        %p325 = pneg %p135
      $region46: #{cross_entropy_2d.1} parent=27 // pred_check_branch
        %327 = sbr.rel (%p325) target = $region48
      $region47: #{cross_entropy_2d.1} parent=27 // pred_region
        _
      $region48: #{cross_entropy_2d.1} parent=27 // pred_fallthru
        _
    $region28: #{cross_entropy_2d.1} parent=5 // pred_fallthru
      _
    %p328 = scmp.le.s32.totalorder 2, %s10
    // Predicated region
    $region49: #{cross_entropy_2d.1} parent=5 // pred_check
      %p329 = pneg %p328
    $region50: #{cross_entropy_2d.1} parent=5 // pred_check_branch
      %331 = sbr.rel (%p329) target = $region52
    $region51: #{cross_entropy_2d.1} parent=5 // pred_region
      %s332 = ssub.s32 %s10, 2
      // Predicated region
      $region53: #{cross_entropy_2d.1} parent=51 // pred_check
        %p333 = pneg %p115
      $region54: #{cross_entropy_2d.1} parent=51 // pred_check_branch
        %335 = sbr.rel (%p333) target = $region56
      $region55: #{cross_entropy_2d.1} parent=51 // pred_region
        %p336 = scmp.lt.s32.totalorder %s21, 1
        %s337 = scalar_select %p336, %s21, 1
        %s338 = smul.addr %s337, 8
        %s339 = scalar_lea.vmem %s2, %s338
      $region56: #{cross_entropy_2d.1} parent=51 // pred_fallthru
        _
      // Predicated region
      $region57: #{cross_entropy_2d.1} parent=51 // pred_check
        %p340 = pneg %p141
      $region58: #{cross_entropy_2d.1} parent=51 // pred_check_branch
        %342 = sbr.rel (%p340) target = $region60
      $region59: #{cross_entropy_2d.1} parent=51 // pred_region
        %p343 = scmp.lt.s32.totalorder %s21, 1
        %s344 = scalar_select %p343, %s21, 1
        %s345 = smul.addr %s344, 8
        %s346 = scalar_lea.vmem %s3, %s345
      $region60: #{cross_entropy_2d.1} parent=51 // pred_fallthru
        _
    $region52: #{cross_entropy_2d.1} parent=5 // pred_fallthru
      _
  $region6: #{cross_entropy_2d.1} parent=0 // loop_footer
    %s14 = sadd.s32 1, %s10
  $region7: #{cross_entropy_2d.1} parent=0 // loop_footer_branch
    %9 = sbr.rel target = $region3
  $region8: #{cross_entropy_2d.1} parent=0 // loop_exit
    _

</llo_original>
